<compile_context>
chip_gen: v5e
topology: v5e:2x2
jax: 0.10.0
libtpu: 0.0.40
codegen_flags: <defaults>
</compile_context>

<pallas_src>
import functools

import jax
import jax.numpy as jnp
from jax.experimental import pallas as pl
from jax.experimental.pallas import tpu as pltpu

_NUM_PAR = 2  # per-core partial accumulators (exploits v7x's 2 TCs; harmless on v5e/v6e)


def _ce_ls_kernel(logits_ref, target_ref, loss_ref, count_ref,
                  loss_acc, count_acc, *,
                  smoothing, gamma, ignore_index, num_classes):
    i = pl.program_id(1)                       # reduction axis over row tiles
    n_inner = pl.num_programs(1)

    # Zero the per-core resident accumulators at the start of each parallel slice.
    @pl.when(i == 0)
    def _():
        loss_acc[...] = jnp.zeros_like(loss_acc)
        count_acc[...] = jnp.zeros_like(count_acc)

    logits = logits_ref[...].astype(jnp.float32)     # [tm, C]
    tgt = target_ref[...]                            # [tm, 1] int32
    tm, C = logits.shape

    # log-softmax over the class (lane) axis; compute exp once and reuse it for pt.
    m = jnp.max(logits, axis=1, keepdims=True)
    shifted = logits - m
    exp_shifted = jnp.exp(shifted)                          # single full-width EUP pass
    sum_exp = jnp.sum(exp_shifted, axis=1, keepdims=True)   # [tm, 1]
    logs = shifted - jnp.log(sum_exp)                       # [tm, C]
    pt = exp_shifted * (1.0 / sum_exp)                      # no second full-width exp

    # Smoothed one-hot labels fused into a single select (no one_hot temporary).
    class_ids = jax.lax.broadcasted_iota(jnp.int32, (tm, C), 1)
    off_val = smoothing / num_classes
    on_val = (1.0 - smoothing) + off_val
    smooth = jnp.where(class_ids == tgt, on_val, off_val)

    # Focal modulation (1 - pt)^gamma: integer gamma -> repeated multiply (no exp/log).
    f = 1.0 - pt
    if float(gamma) == int(gamma) and int(gamma) >= 0:
        g = int(gamma)
        if g == 0:
            focal = jnp.ones_like(f)
        else:
            focal = f
            for _ in range(g - 1):
                focal = focal * f
    else:
        focal = jnp.power(f, gamma)

    row_loss = -jnp.sum(focal * logs * smooth, axis=1, keepdims=True)   # [tm, 1]
    mask = (tgt != ignore_index).astype(jnp.float32)                    # [tm, 1]

    loss_acc[...] += row_loss * mask
    count_acc[...] += mask

    # Finalize once per parallel slice: cross-sublane reduce + lane-dense store.
    @pl.when(i == n_inner - 1)
    def _():
        loss_ref[...] = jnp.broadcast_to(jnp.sum(loss_acc[...]), loss_ref.shape)
        count_ref[...] = jnp.broadcast_to(jnp.sum(count_acc[...]), count_ref.shape)


def _round_up(x, m):
    return ((x + m - 1) // m) * m


def _pick_tile_rows(rows_per_core, C, itemsize):
    # Budget ~12 MiB for the double-buffered logits blocks plus ~4 live [tm,C] f32
    # temporaries; conservative enough for v7x's 64 MiB VMEM (32 MiB scoped).
    budget = 12 * 1024 * 1024
    per_row = C * (2 * itemsize + 4 * 4)
    tile = max(8, min(1024, budget // max(per_row, 1)))
    sub = 8 if itemsize >= 4 else 16          # bf16 inputs need sublane multiples of 16
    tile = max(sub, (tile // sub) * sub)
    tile = min(tile, _round_up(max(rows_per_core, 1), sub))   # don't over-pad tiny inputs
    return tile


def ce_loss_with_ls(logits, target, *, classes, smoothing=0.1, gamma=3.0,
                    ignore_index=-1):
    """logits: [B, T, C] float, target: [B, T] int. Returns scalar f32 loss."""
    B, T, C = logits.shape
    assert C == classes
    N = B * T

    itemsize = jnp.dtype(logits.dtype).itemsize
    rows_per_core = -(-N // _NUM_PAR)
    tile_rows = _pick_tile_rows(rows_per_core, C, itemsize)
    inner_tiles = -(-rows_per_core // tile_rows)
    n_pad = _NUM_PAR * inner_tiles * tile_rows

    logits2 = logits.reshape(N, C)
    target2 = target.reshape(N, 1).astype(jnp.int32)
    if n_pad != N:
        # Padded rows carry ignore_index targets, so they contribute nothing.
        logits2 = jnp.pad(logits2, ((0, n_pad - N), (0, 0)))
        target2 = jnp.pad(target2, ((0, n_pad - N), (0, 0)),
                          constant_values=ignore_index)

    kernel = functools.partial(
        _ce_ls_kernel, smoothing=float(smoothing), gamma=float(gamma),
        ignore_index=int(ignore_index), num_classes=int(classes))

    cost = pl.CostEstimate(
        flops=int(10 * n_pad * C),
        transcendentals=int(n_pad * C),
        bytes_accessed=int(n_pad * C * itemsize + n_pad * 4 + 2 * _NUM_PAR * 8 * 128 * 4))

    loss_parts, count_parts = pl.pallas_call(
        kernel,
        out_shape=(jax.ShapeDtypeStruct((_NUM_PAR * 8, 128), jnp.float32),
                   jax.ShapeDtypeStruct((_NUM_PAR * 8, 128), jnp.float32)),
        grid_spec=pltpu.PrefetchScalarGridSpec(
            num_scalar_prefetch=0,
            grid=(_NUM_PAR, inner_tiles),
            in_specs=[
                pl.BlockSpec((tile_rows, C), lambda c, i: (c * inner_tiles + i, 0)),
                pl.BlockSpec((tile_rows, 1), lambda c, i: (c * inner_tiles + i, 0)),
            ],
            out_specs=(pl.BlockSpec((8, 128), lambda c, i: (c, 0)),
                       pl.BlockSpec((8, 128), lambda c, i: (c, 0))),
            scratch_shapes=[pltpu.VMEM((tile_rows, 1), jnp.float32),
                            pltpu.VMEM((tile_rows, 1), jnp.float32)]),
        compiler_params=pltpu.CompilerParams(
            dimension_semantics=("parallel", "arbitrary"),
            vmem_limit_bytes=32 * 1024 * 1024),
        cost_estimate=cost,
    )(logits2, target2)

    # Each parallel slice broadcast-filled its (8,128) block with its partial sum.
    loss_sum = jnp.sum(loss_parts[::8, 0])
    valid = jnp.sum(count_parts[::8, 0])
    # Same semantics as PyTorch's .mean() over the boolean-selected rows.
    # TODO(synk): division is undefined (NaN) if every target equals ignore_index,
    # matching the PyTorch original.
    return (loss_sum / valid).astype(jnp.float32)


def _reference(logits, target, *, classes, smoothing=0.1, gamma=3.0, ignore_index=-1):
    """Pure-JAX replica of the PyTorch forward for verification."""
    mask = (target != ignore_index).reshape(-1)
    logits2 = logits.reshape(-1, classes)
    tgt2 = target.reshape(-1)
    logs = jax.nn.log_softmax(logits2, axis=1)
    pt = jnp.exp(logs)
    one_hot = jax.nn.one_hot(jnp.where(tgt2 < 0, 0, tgt2), classes) * (tgt2 >= 0)[:, None]
    smooth = one_hot * (1.0 - smoothing) + smoothing / classes
    row = -jnp.sum(jnp.power(1.0 - pt, gamma) * logs * smooth, axis=1)
    return jnp.sum(row * mask) / jnp.sum(mask)


if __name__ == "__main__":
    # Small shapes consistent with captioning: batch=2, seq=8, classes=32.
    B, T, C = 2, 8, 32
    key = jax.random.PRNGKey(0)
    k_logits, k_tgt = jax.random.split(key)

    logits = jax.random.normal(k_logits, (B, T, C), dtype=jnp.float32)
    target = jax.random.randint(k_tgt, (B, T), 0, C, dtype=jnp.int32)
    # Mark a few positions as ignored (ignore_index = -1).
    target = target.at[0, 6].set(-1).at[1, 7].set(-1)

    loss = ce_loss_with_ls(logits, target, classes=C, smoothing=0.1,
                           gamma=3.0, ignore_index=-1)
    loss = jax.block_until_ready(loss)

    ref = _reference(logits, target, classes=C, smoothing=0.1, gamma=3.0,
                     ignore_index=-1)
    assert jnp.allclose(loss, ref, atol=2e-5, rtol=2e-5), (loss, ref)

    print("KERNEL_OK")
</pallas_src>

<mosaic_0001>
module attributes {stable_mosaic.version = 11 : i64} {
  func.func @_ce_ls_kernel(%arg0: i32, %arg1: i32, %arg2: memref<8x32xf32, #tpu.memory_space<vmem>>, %arg3: memref<8x1xi32, #tpu.memory_space<vmem>>, %arg4: memref<8x128xf32, #tpu.memory_space<vmem>>, %arg5: memref<8x128xf32, #tpu.memory_space<vmem>>, %arg6: memref<8x1xf32, #tpu.memory_space<vmem>>, %arg7: memref<8x1xf32, #tpu.memory_space<vmem>>) attributes {dimension_semantics = [#tpu.dimension_semantics<parallel>, #tpu.dimension_semantics<arbitrary>], iteration_bounds = array<i64: 2, 1>, scalar_prefetch = 0 : i64, scratch_operands = 2 : i64, tpu.core_type = #tpu.core_type<tc>, window_params = [{transform_indices = @transform_0, window_bounds = array<i64: 8, 32>}, {transform_indices = @transform_1, window_bounds = array<i64: 8, 1>}, {transform_indices = @transform_2, window_bounds = array<i64: 8, 128>}, {transform_indices = @transform_3, window_bounds = array<i64: 8, 128>}]} {
    %c0_i32 = arith.constant 0 : i32
    %0 = arith.cmpi eq, %arg1, %c0_i32 : i32
    %1 = arith.extui %0 : i1 to i32
    %c0_i32_0 = arith.constant 0 : i32
    %2 = arith.cmpi ne, %1, %c0_i32_0 : i32
    scf.if %2 {
      %cst_21 = arith.constant 0.000000e+00 : f32
      %49 = vector.broadcast %cst_21 : f32 to vector<8x1xf32>
      %c0_22 = arith.constant 0 : index
      %c0_23 = arith.constant 0 : index
      %50 = vector.load %arg6[%c0_22, %c0_23] : memref<8x1xf32, #tpu.memory_space<vmem>>, vector<8x1xf32>
      tpu.vector_store %arg6[%c0_22, %c0_23], %49 {strides = array<i32>} : memref<8x1xf32, #tpu.memory_space<vmem>>, vector<8x1xf32>,
      %cst_24 = arith.constant 0.000000e+00 : f32
      %51 = vector.broadcast %cst_24 : f32 to vector<8x1xf32>
      %c0_25 = arith.constant 0 : index
      %c0_26 = arith.constant 0 : index
      %52 = vector.load %arg7[%c0_25, %c0_26] : memref<8x1xf32, #tpu.memory_space<vmem>>, vector<8x1xf32>
      tpu.vector_store %arg7[%c0_25, %c0_26], %51 {strides = array<i32>} : memref<8x1xf32, #tpu.memory_space<vmem>>, vector<8x1xf32>,
    } else {
    }
    %c0 = arith.constant 0 : index
    %c0_1 = arith.constant 0 : index
    %3 = vector.load %arg2[%c0, %c0_1] : memref<8x32xf32, #tpu.memory_space<vmem>>, vector<8x32xf32>
    %c0_2 = arith.constant 0 : index
    %c0_3 = arith.constant 0 : index
    %4 = vector.load %arg3[%c0_2, %c0_3] : memref<8x1xi32, #tpu.memory_space<vmem>>, vector<8x1xi32>
    %cst = arith.constant dense<0xFF800000> : vector<8xf32>
    %5 = vector.multi_reduction <maximumf>, %3, %cst [1] : vector<8x32xf32> to vector<8xf32>
    %6 = vector.shape_cast %5 : vector<8xf32> to vector<8x1xf32>
    %7 = vector.broadcast %6 : vector<8x1xf32> to vector<8x32xf32>
    %8 = arith.subf %3, %7 : vector<8x32xf32>
    %9 = math.exp %8 : vector<8x32xf32>
    %cst_4 = arith.constant dense<0.000000e+00> : vector<8xf32>
    %10 = vector.multi_reduction <add>, %9, %cst_4 [1] : vector<8x32xf32> to vector<8xf32>
    %11 = vector.shape_cast %10 : vector<8xf32> to vector<8x1xf32>
    %12 = math.log %11 : vector<8x1xf32>
    %13 = vector.broadcast %12 : vector<8x1xf32> to vector<8x32xf32>
    %14 = arith.subf %8, %13 : vector<8x32xf32>
    %cst_5 = arith.constant 1.000000e+00 : f32
    %15 = vector.broadcast %cst_5 : f32 to vector<8x1xf32>
    %16 = arith.divf %15, %11 : vector<8x1xf32>
    %17 = vector.broadcast %16 : vector<8x1xf32> to vector<8x32xf32>
    %18 = arith.mulf %9, %17 : vector<8x32xf32>
    %19 = tpu.iota {dimensions = array<i32: 1>} : vector<8x32xi32>
    %20 = vector.broadcast %4 : vector<8x1xi32> to vector<8x32xi32>
    %21 = arith.cmpi eq, %19, %20 : vector<8x32xi32>
    %cst_6 = arith.constant 0.903124988 : f32
    %cst_7 = arith.constant 3.125000e-03 : f32
    %22 = vector.broadcast %cst_6 : f32 to vector<8x32xf32>
    %23 = vector.broadcast %cst_7 : f32 to vector<8x32xf32>
    %24 = arith.select %21, %22, %23 : vector<8x32xi1>, vector<8x32xf32>
    %cst_8 = arith.constant 1.000000e+00 : f32
    %25 = vector.broadcast %cst_8 : f32 to vector<8x32xf32>
    %26 = arith.subf %25, %18 : vector<8x32xf32>
    %27 = arith.mulf %26, %26 : vector<8x32xf32>
    %28 = arith.mulf %27, %26 : vector<8x32xf32>
    %29 = arith.mulf %28, %14 : vector<8x32xf32>
    %30 = arith.mulf %29, %24 : vector<8x32xf32>
    %cst_9 = arith.constant dense<0.000000e+00> : vector<8xf32>
    %31 = vector.multi_reduction <add>, %30, %cst_9 [1] : vector<8x32xf32> to vector<8xf32>
    %32 = vector.shape_cast %31 : vector<8xf32> to vector<8x1xf32>
    %cst_10 = arith.constant 0.000000e+00 : f32
    %33 = vector.broadcast %cst_10 : f32 to vector<8x1xf32>
    %34 = arith.subf %33, %32 : vector<8x1xf32>
    %c-1_i32 = arith.constant -1 : i32
    %35 = vector.broadcast %c-1_i32 : i32 to vector<8x1xi32>
    %36 = arith.cmpi ne, %4, %35 : vector<8x1xi32>
    %37 = arith.extui %36 : vector<8x1xi1> to vector<8x1xi32>
    %38 = arith.sitofp %37 : vector<8x1xi32> to vector<8x1xf32>
    %c0_11 = arith.constant 0 : index
    %c0_12 = arith.constant 0 : index
    %39 = vector.load %arg6[%c0_11, %c0_12] : memref<8x1xf32, #tpu.memory_space<vmem>>, vector<8x1xf32>
    %40 = arith.mulf %34, %38 : vector<8x1xf32>
    %41 = arith.addf %39, %40 : vector<8x1xf32>
    %c0_13 = arith.constant 0 : index
    %c0_14 = arith.constant 0 : index
    %42 = vector.load %arg6[%c0_13, %c0_14] : memref<8x1xf32, #tpu.memory_space<vmem>>, vector<8x1xf32>
    tpu.vector_store %arg6[%c0_13, %c0_14], %41 {strides = array<i32>} : memref<8x1xf32, #tpu.memory_space<vmem>>, vector<8x1xf32>,
    %c0_15 = arith.constant 0 : index
    %c0_16 = arith.constant 0 : index
    %43 = vector.load %arg7[%c0_15, %c0_16] : memref<8x1xf32, #tpu.memory_space<vmem>>, vector<8x1xf32>
    %44 = arith.addf %43, %38 : vector<8x1xf32>
    %c0_17 = arith.constant 0 : index
    %c0_18 = arith.constant 0 : index
    %45 = vector.load %arg7[%c0_17, %c0_18] : memref<8x1xf32, #tpu.memory_space<vmem>>, vector<8x1xf32>
    tpu.vector_store %arg7[%c0_17, %c0_18], %44 {strides = array<i32>} : memref<8x1xf32, #tpu.memory_space<vmem>>, vector<8x1xf32>,
    %c0_i32_19 = arith.constant 0 : i32
    %46 = arith.cmpi eq, %arg1, %c0_i32_19 : i32
    %47 = arith.extui %46 : i1 to i32
    %c0_i32_20 = arith.constant 0 : i32
    %48 = arith.cmpi ne, %47, %c0_i32_20 : i32
    scf.if %48 {
      %c0_21 = arith.constant 0 : index
      %c0_22 = arith.constant 0 : index
      %49 = vector.load %arg6[%c0_21, %c0_22] : memref<8x1xf32, #tpu.memory_space<vmem>>, vector<8x1xf32>
      %50 = vector.shape_cast %49 : vector<8x1xf32> to vector<1x8x1xf32>
      %cst_23 = arith.constant dense<0.000000e+00> : vector<1xf32>
      %51 = vector.multi_reduction <add>, %50, %cst_23 [1, 2] : vector<1x8x1xf32> to vector<1xf32>
      %52 = vector.shape_cast %51 : vector<1xf32> to vector<1x1x1xf32>
      %53 = vector.extract %52[0, 0, 0] : f32 from vector<1x1x1xf32>
      %54 = vector.broadcast %53 : f32 to vector<8x128xf32>
      %c0_24 = arith.constant 0 : index
      %c0_25 = arith.constant 0 : index
      %55 = vector.load %arg4[%c0_24, %c0_25] : memref<8x128xf32, #tpu.memory_space<vmem>>, vector<8x128xf32>
      tpu.vector_store %arg4[%c0_24, %c0_25], %54 {strides = array<i32>} : memref<8x128xf32, #tpu.memory_space<vmem>>, vector<8x128xf32>,
      %c0_26 = arith.constant 0 : index
      %c0_27 = arith.constant 0 : index
      %56 = vector.load %arg7[%c0_26, %c0_27] : memref<8x1xf32, #tpu.memory_space<vmem>>, vector<8x1xf32>
      %57 = vector.shape_cast %56 : vector<8x1xf32> to vector<1x8x1xf32>
      %cst_28 = arith.constant dense<0.000000e+00> : vector<1xf32>
      %58 = vector.multi_reduction <add>, %57, %cst_28 [1, 2] : vector<1x8x1xf32> to vector<1xf32>
      %59 = vector.shape_cast %58 : vector<1xf32> to vector<1x1x1xf32>
      %60 = vector.extract %59[0, 0, 0] : f32 from vector<1x1x1xf32>
      %61 = vector.broadcast %60 : f32 to vector<8x128xf32>
      %c0_29 = arith.constant 0 : index
      %c0_30 = arith.constant 0 : index
      %62 = vector.load %arg5[%c0_29, %c0_30] : memref<8x128xf32, #tpu.memory_space<vmem>>, vector<8x128xf32>
      tpu.vector_store %arg5[%c0_29, %c0_30], %61 {strides = array<i32>} : memref<8x128xf32, #tpu.memory_space<vmem>>, vector<8x128xf32>,
    } else {
    }
    return
  }
  func.func @transform_0(%arg0: i32, %arg1: i32) -> (i32, i32) {
    %c1_i32 = arith.constant 1 : i32
    %0 = arith.muli %arg0, %c1_i32 : i32
    %1 = arith.addi %0, %arg1 : i32
    %c0_i32 = arith.constant 0 : i32
    %c0_i32_0 = arith.constant 0 : i32
    return %1, %c0_i32 : i32, i32
  }
  func.func @transform_1(%arg0: i32, %arg1: i32) -> (i32, i32) {
    %c1_i32 = arith.constant 1 : i32
    %0 = arith.muli %arg0, %c1_i32 : i32
    %1 = arith.addi %0, %arg1 : i32
    %c0_i32 = arith.constant 0 : i32
    %c0_i32_0 = arith.constant 0 : i32
    return %1, %c0_i32 : i32, i32
  }
  func.func @transform_2(%arg0: i32, %arg1: i32) -> (i32, i32) {
    %c0_i32 = arith.constant 0 : i32
    %c0_i32_0 = arith.constant 0 : i32
    return %arg0, %c0_i32 : i32, i32
  }
  func.func @transform_3(%arg0: i32, %arg1: i32) -> (i32, i32) {
    %c0_i32 = arith.constant 0 : i32
    %c0_i32_0 = arith.constant 0 : i32
    return %arg0, %c0_i32 : i32, i32
  }
}

</mosaic_0001>

<llo_original>
// kernel: tpu_custom_call.1
$region0: #{tpu_custom_call.1}
  #allocation0 [shape = 'u32[]', space=smem, size = 0x4, offset = 0x4, fixed_abs, tag = 'smem constant byte address 0x4 - core index']
  #allocation1 [shape = 'u32[72,128]{1,0:T(1,128)}', space=vmem, size = 0x9000, scoped, tag = 'internal scratch']
  #allocation2 [shape = 'f32[8,1]{1,0:T(8,128)}', space=vmem, size = 0x1000, scoped, tag = 'scratch operand']
  #allocation3 [shape = 'f32[8,1]{1,0:T(8,128)}', space=vmem, size = 0x1000, scoped, tag = 'scratch operand']
  %s0 = inlined_call_operand.vmem [shape: f32[16,32], index: 0, kind: input, shape index: {}]
  %s1 = inlined_call_operand.vmem [shape: s32[16,1], index: 1, kind: input, shape index: {}]
  %s2 = inlined_call_operand.hbm [shape: f32[16,128], index: 2, kind: output, shape index: {0}]
  %s3 = inlined_call_operand.hbm [shape: f32[16,128], index: 3, kind: output, shape index: {1}]
  %4 = xla_tuple %s2, %s3
  %s5 = sld [smem:[#allocation0]]
  $region57: #{tpu_custom_call.1} parent=0
    _
  %s7 = ssub.s32 1, %s5
  %s8 = scalar_select 0, %s7, %s5
  $region1: #{tpu_custom_call.1} parent=0
    #allocation4 [shape = 'u8[8192]{0}', space=vmem, size = 0x2000, scoped, tag = 'output window, operand 0']
    #allocation5 [shape = 's32[2]{0}', space=sflag, size = 0x8, scoped, tag = 'scoped memory for tpu_custom_call.1']
    #allocation6 [shape = 'u8[8192]{0}', space=vmem, size = 0x2000, scoped, tag = 'output window, operand 1']
    #allocation7 [shape = 's32[2]{0}', space=sflag, size = 0x8, scoped, tag = 'scoped memory for tpu_custom_call.1']
    %9 = vsyncpa [#allocation5], 0
    %s10 = scalar_lea.sflag [#allocation5], 1
    %11 = vsyncpa %s10, 0
    %12 = vsyncpa [#allocation7], 0
    %s13 = scalar_lea.sflag [#allocation7], 1
    %14 = vsyncpa %s13, 0
    loop: start=0, step=1, limit=4
    $region2: #{tpu_custom_call.1} parent=1 // loop_pre_header
      _
    $region3: #{tpu_custom_call.1} parent=1 // loop_header
      %s16 = sphi 0, %s20
      %p17 = scmp.ge.s32.totalorder %s16, 4
      %s23 = sphi 0, %s35
      %s24 = sphi 0, %s31
      %s25 = sphi 0, %s23
      %s26 = sphi 0, %s24
      %s27 = sphi 0, %s25
      %s28 = sphi 0, %s26
      %s40 = sphi 0, %s42
      %s43 = sphi 0, %s40
      %s44 = sphi 0, %s43
      %s60 = sphi 0, %s44
      %s68 = sphi 0, %s70
      %s71 = sphi 0, %s68
      %s72 = sphi 0, %s71
      %s88 = sphi 0, %s72
      %s94 = sphi 0, %s96
      %s97 = sphi 0, %s94
      %s98 = sphi 0, %s97
      %s114 = sphi 0, %s98
      %s120 = sphi 0, %s122
      %s123 = sphi 0, %s120
      %s124 = sphi 0, %s123
      %s140 = sphi 0, %s124
    $region4: #{tpu_custom_call.1} parent=1 // loop_header_branch
      %19 = sbr.rel (%p17) target = $region8
    $region5: #{tpu_custom_call.1} parent=1 // loop_body
      %s21 = ssub.s32 %s16, 1
      %s22 = ssub.s32 %s16, 2
      %s29 = sadd.s32 1, %s24
      %p30 = scmp.ge.s32.totalorder %s29, 1
      %s31 = scalar_select %p30, 0, %s29
      %s32 = sadd.s32 1, %s23
      %s33 = scalar_select %p30, %s32, %s23
      %p34 = scmp.ge.s32.totalorder %s33, 2
      %s35 = scalar_select %p34, 0, %s33
      %s36 = sadd.s32 %s23, %s24
      %s37 = sadd.s32 %s35, %s31
      %s38 = ssub.s32 %s36, %s37
      %p39 = scmp.eq.s32.totalorder %s38, 0
      %s41 = sadd.s32 %s40, 1
      %s42 = scalar_select %p39, %s40, %s41
      %p45 = pneg %p39
      %p46 = scmp.eq.s32.totalorder %s16, 1
      %p47 = por %p45, %p46
      %p48 = scmp.ne.s32.totalorder %s40, %s43
      %p49 = scmp.eq.s32.totalorder %s16, 0
      %p50 = por %p48, %p49
      %p51 = scmp.ne.s32.totalorder %s40, %s43
      %p52 = scmp.eq.s32.totalorder %s21, 1
      %p53 = por %p51, %p52
      %p54 = scmp.ne.s32.totalorder %s43, %s44
      %p55 = scmp.eq.s32.totalorder %s21, 0
      %p56 = por %p54, %p55
      %p57 = scmp.ne.s32.totalorder %s43, %s44
      %p58 = scmp.eq.s32.totalorder %s22, 1
      %p59 = por %p57, %p58
      %p61 = scmp.ne.s32.totalorder %s44, %s60
      %p62 = scmp.eq.s32.totalorder %s22, 0
      %p63 = por %p61, %p62
      %s64 = sadd.s32 %s23, %s24
      %s65 = sadd.s32 %s35, %s31
      %s66 = ssub.s32 %s64, %s65
      %p67 = scmp.eq.s32.totalorder %s66, 0
      %s69 = sadd.s32 %s68, 1
      %s70 = scalar_select %p67, %s68, %s69
      %p73 = pneg %p67
      %p74 = scmp.eq.s32.totalorder %s16, 1
      %p75 = por %p73, %p74
      %p76 = scmp.ne.s32.totalorder %s68, %s71
      %p77 = scmp.eq.s32.totalorder %s16, 0
      %p78 = por %p76, %p77
      %p79 = scmp.ne.s32.totalorder %s68, %s71
      %p80 = scmp.eq.s32.totalorder %s21, 1
      %p81 = por %p79, %p80
      %p82 = scmp.ne.s32.totalorder %s71, %s72
      %p83 = scmp.eq.s32.totalorder %s21, 0
      %p84 = por %p82, %p83
      %p85 = scmp.ne.s32.totalorder %s71, %s72
      %p86 = scmp.eq.s32.totalorder %s22, 1
      %p87 = por %p85, %p86
      %p89 = scmp.ne.s32.totalorder %s72, %s88
      %p90 = scmp.eq.s32.totalorder %s22, 0
      %p91 = por %p89, %p90
      %s92 = ssub.s32 %s23, %s35
      %p93 = scmp.eq.s32.totalorder %s92, 0
      %s95 = sadd.s32 %s94, 1
      %s96 = scalar_select %p93, %s94, %s95
      %p99 = pneg %p93
      %p100 = scmp.eq.s32.totalorder %s16, 1
      %p101 = por %p99, %p100
      %p102 = scmp.ne.s32.totalorder %s94, %s97
      %p103 = scmp.eq.s32.totalorder %s16, 0
      %p104 = por %p102, %p103
      %p105 = scmp.ne.s32.totalorder %s94, %s97
      %p106 = scmp.eq.s32.totalorder %s21, 1
      %p107 = por %p105, %p106
      %p108 = scmp.ne.s32.totalorder %s97, %s98
      %p109 = scmp.eq.s32.totalorder %s21, 0
      %p110 = por %p108, %p109
      %p111 = scmp.ne.s32.totalorder %s97, %s98
      %p112 = scmp.eq.s32.totalorder %s22, 1
      %p113 = por %p111, %p112
      %p115 = scmp.ne.s32.totalorder %s98, %s114
      %p116 = scmp.eq.s32.totalorder %s22, 0
      %p117 = por %p115, %p116
      %s118 = ssub.s32 %s23, %s35
      %p119 = scmp.eq.s32.totalorder %s118, 0
      %s121 = sadd.s32 %s120, 1
      %s122 = scalar_select %p119, %s120, %s121
      %p125 = pneg %p119
      %p126 = scmp.eq.s32.totalorder %s16, 1
      %p127 = por %p125, %p126
      %p128 = scmp.ne.s32.totalorder %s120, %s123
      %p129 = scmp.eq.s32.totalorder %s16, 0
      %p130 = por %p128, %p129
      %p131 = scmp.ne.s32.totalorder %s120, %s123
      %p132 = scmp.eq.s32.totalorder %s21, 1
      %p133 = por %p131, %p132
      %p134 = scmp.ne.s32.totalorder %s123, %s124
      %p135 = scmp.eq.s32.totalorder %s21, 0
      %p136 = por %p134, %p135
      %p137 = scmp.ne.s32.totalorder %s123, %s124
      %p138 = scmp.eq.s32.totalorder %s22, 1
      %p139 = por %p137, %p138
      %p141 = scmp.ne.s32.totalorder %s124, %s140
      %p142 = scmp.eq.s32.totalorder %s22, 0
      %p143 = por %p141, %p142
      %p144 = scmp.le.s32.totalorder 1, %s16
      %p145 = scmp.lt.s32.totalorder %s16, 3
      %p146 = pnand %p144, %p145
      %p147 = pneg %p146
      // Predicated region
      $region9: #{tpu_custom_call.1} parent=5 // pred_check
        _
      $region10: #{tpu_custom_call.1} parent=5 // pred_check_branch
        %149 = sbr.rel (%p146) target = $region12
      $region11: #{tpu_custom_call.1} parent=5 // pred_region
        %s150 = ssub.s32 %s16, 1
      $region12: #{tpu_custom_call.1} parent=5 // pred_fallthru
        _
      %p151 = scmp.lt.s32.totalorder %s16, 2
      // Predicated region
      $region13: #{tpu_custom_call.1} parent=5 // pred_check
        %p152 = pneg %p151
      $region14: #{tpu_custom_call.1} parent=5 // pred_check_branch
        %154 = sbr.rel (%p152) target = $region16
      $region15: #{tpu_custom_call.1} parent=5 // pred_region
        // Predicated region
        $region17: #{tpu_custom_call.1} parent=15 // pred_check
          %p155 = pneg %p50
        $region18: #{tpu_custom_call.1} parent=15 // pred_check_branch
          %157 = sbr.rel (%p155) target = $region20
        $region19: #{tpu_custom_call.1} parent=15 // pred_region
          %s158 = sadd.s32 %s23, %s24
          %p159 = scmp.lt.s32.totalorder %s158, 1
          %s160 = scalar_select %p159, %s158, 1
          %s161 = smul.addr %s160, 8
          %s162 = scalar_lea.vmem %s0, %s161
          %s163 = sadd.s32 %s23, %s24
        $region20: #{tpu_custom_call.1} parent=15 // pred_fallthru
          _
        // Predicated region
        $region21: #{tpu_custom_call.1} parent=15 // pred_check
          %p164 = pneg %p78
        $region22: #{tpu_custom_call.1} parent=15 // pred_check_branch
          %166 = sbr.rel (%p164) target = $region24
        $region23: #{tpu_custom_call.1} parent=15 // pred_region
          %s167 = sadd.s32 %s23, %s24
          %p168 = scmp.lt.s32.totalorder %s167, 1
          %s169 = scalar_select %p168, %s167, 1
          %s170 = smul.addr %s169, 8
          %s171 = scalar_lea.vmem %s1, %s170
          %s172 = sadd.s32 %s23, %s24
        $region24: #{tpu_custom_call.1} parent=15 // pred_fallthru
          _
      $region16: #{tpu_custom_call.1} parent=5 // pred_fallthru
        _
      %p173 = scmp.le.s32.totalorder 1, %s16
      %p174 = scmp.lt.s32.totalorder %s16, 3
      %p175 = pnand %p173, %p174
      %p176 = pneg %p175
      // Predicated region
      $region25: #{tpu_custom_call.1} parent=5 // pred_check
        _
      $region26: #{tpu_custom_call.1} parent=5 // pred_check_branch
        %178 = sbr.rel (%p175) target = $region28
      $region27: #{tpu_custom_call.1} parent=5 // pred_region
        %s179 = ssub.s32 %s16, 1
        %s180 = sadd.s32 %s25, %s26
        %p181 = scmp.lt.s32.totalorder %s180, 1
        %s182 = scalar_select %p181, %s180, 1
        %s183 = smul.addr %s182, 8
        %s184 = scalar_lea.vmem %s0, %s183
        %p185 = pneg %p56
        %p186 = pneg %p53
        %s187 = sadd.s32 %s25, %s26
        %p188 = scmp.lt.s32.totalorder %s187, 1
        %s189 = scalar_select %p188, %s187, 1
        %s190 = smul.addr %s189, 8
        %s191 = scalar_lea.vmem %s1, %s190
        %p192 = pneg %p84
        %p193 = pneg %p81
        %p194 = pneg %p110
        %p195 = pneg %p107
        %s196 = sand.u32 %s97, 1
        %s197 = scalar_lea.sflag [#allocation5], %s196
        %s198 = sand.u32 %s97, 1
        %s199 = smul.addr %s198, 8
        %s200 = scalar_lea.vmem [#allocation4], %s199
        %p201 = pneg %p136
        %p202 = pneg %p133
        %s203 = sand.u32 %s123, 1
        %s204 = scalar_lea.sflag [#allocation7], %s203
        %s205 = sand.u32 %s123, 1
        %s206 = smul.addr %s205, 8
        %s207 = scalar_lea.vmem [#allocation6], %s206
        %s208 = sadd.s32 %s25, %s26
        %p209 = scmp.lt.s32.totalorder %s208, 1
        %s210 = scalar_select %p209, %s208, 1
        %s211 = smul.addr %s210, 8
        %s212 = scalar_lea.vmem %s0, %s211
        %s213 = sadd.s32 %s25, %s26
        %s214 = sadd.s32 %s25, %s26
        %p215 = scmp.lt.s32.totalorder %s214, 1
        %s216 = scalar_select %p215, %s214, 1
        %s217 = smul.addr %s216, 8
        %s218 = scalar_lea.vmem %s1, %s217
        %s219 = sadd.s32 %s25, %s26
        %p220 = scmp.eq.s32.totalorder %s26, 0
        // Predicated region
        $region29: #{tpu_custom_call.1} parent=27 // pred_check
          %p221 = pneg %p220
        $region30: #{tpu_custom_call.1} parent=27 // pred_check_branch
          %223 = sbr.rel (%p221) target = $region32
        $region31: #{tpu_custom_call.1} parent=27 // pred_region
          %vm224 = vcmask 7168
          %225 = vst.msk [vmem:[#allocation2] sm:$0xff] %vm224, 0.0
          %226 = vst.msk [vmem:[#allocation3] sm:$0xff] %vm224, 0.0
        $region32: #{tpu_custom_call.1} parent=27 // pred_fallthru
          _
        %v227 = vld [vmem:[%s212] sm:$0xff]
        %v228 = vld [vmem:[%s218] sm:$0xff]
        %vm229 = vcmask 261120
        %v230 = vsel %vm229, %v227, -inf
        %231 = vmax.xlane.f32.xlu0 %v230
        %v232 = vpop.xlane.xlu0 %231
        %v233 = vsub.f32 %v227, %v232
        %v234 = vmul.f32 %v233, 1.442695
        %v235 = vpow.pop %v234
        %v236 = vsel %vm229, %v235, 0.0
        %237 = vadd.xlane.f32.xlu0 %v236
        %v238 = vpop.xlane.xlu0 %237
        %v239 = vlog2.pop %v238
        %v240 = vmul.f32 %v239, 0.6931472
        %v241 = vsub.f32 %v233, %v240
        %v242 = vrcp.pop %v238
        %v243 = vmul.f32 %v238, %v242
        %v244 = vsub.f32 1.0, %v243
        %v245 = vmul.f32 %v242, %v244
        %v246 = vadd.f32 %v242, %v245
        %vm247 = vweird.f32 %v238
        %vm248 = vweird.f32 %v242
        %vm249 = vmor %vm247, %vm248
        %v250 = vsel %vm249, %v242, %v246
        %v251 = vand.u32 2147483647, %v238
        %vm252 = vcmp.eq.f32.partialorder %v251, 8.507059e+37
        %v253 = vand.u32 %v238, 2147483648
        %v254 = vor.u32 1.1754944e-38, %v253
        %v255 = vsel %vm252, %v254, %v250
        %v256 = vmul.f32 1.0, %v255
        %v257 = vmul.f32 %v235, %v256
        %v258 = vlaneseq
        %v259 = vand.u32 %v258, 127
        %260 = vset.pattern.permute.xlu0 0
        %261 = vperm.xlu0 %260, %v228
        %v262 = vpop.permute.xlu0 %261
        %vm263 = vcmp.eq.s32.totalorder %v259, %v262
        %v264 = vsel %vm263, 0.903125, 0.003125
        %v265 = vsub.f32 1.0, %v257
        %v266 = vmul.f32 %v265, %v265
        %v267 = vmul.f32 %v266, %v265
        %v268 = vmul.f32 %v267, %v241
        %v269 = vmul.f32 %v268, %v264
        %v270 = vsel %vm229, %v269, 0.0
        %271 = vadd.xlane.f32.xlu0 %v270
        %v272 = vpop.xlane.xlu0 %271
        %v273 = vsub.f32 0.0, %v272
        %vm274 = vcmp.ne.s32.totalorder %v228, 4294967295
        %v275 = vsel %vm274, 1, 0
        %v276 = vcvt.s32.f32 %v275
        %v277 = vld [vmem:[#allocation2] sm:$0xff]
        %v278 = vmul.f32 %v273, %v276
        %v279 = vadd.f32 %v277, %v278
        %vm280 = vcmask 7168
        %281 = vst.msk [vmem:[#allocation2] sm:$0xff] %vm280, %v279
        %v282 = vld [vmem:[#allocation3] sm:$0xff]
        %v283 = vadd.f32 %v282, %v276
        %284 = vst.msk [vmem:[#allocation3] sm:$0xff] %vm280, %v283
        // Predicated region
        $region33: #{tpu_custom_call.1} parent=27 // pred_check
          %p285 = pneg %p220
        $region34: #{tpu_custom_call.1} parent=27 // pred_check_branch
          %287 = sbr.rel (%p285) target = $region36
        $region35: #{tpu_custom_call.1} parent=27 // pred_region
          %v288 = vld [vmem:[#allocation2] sm:$0xff]
          %v289 = vsel %vm280, %v288, 0.0
          %290 = vadd.xlane.f32.xlu0 %v289
          %v291 = vpop.xlane.xlu0 %290
          %v292 = vrot.slane %v291, 4
          %v293 = vadd.f32 %v291, %v292
          %v294 = vrot.slane %v293, 2
          %v295 = vadd.f32 %v293, %v294
          %v296 = vrot.slane %v295, 1
          %v297 = vadd.f32 %v295, %v296
          %s298 = vtos %v297
          %v299 = vstv %s298
          %300 = vst [vmem:[%s200] sm:$0xff] %v299
          %v301 = vld [vmem:[#allocation3] sm:$0xff]
          %v302 = vsel %vm280, %v301, 0.0
          %303 = vadd.xlane.f32.xlu0 %v302
          %v304 = vpop.xlane.xlu0 %303
          %v305 = vrot.slane %v304, 4
          %v306 = vadd.f32 %v304, %v305
          %v307 = vrot.slane %v306, 2
          %v308 = vadd.f32 %v306, %v307
          %v309 = vrot.slane %v308, 1
          %v310 = vadd.f32 %v308, %v309
          %s311 = vtos %v310
          %v312 = vstv %s311
          %313 = vst [vmem:[%s207] sm:$0xff] %v312
        $region36: #{tpu_custom_call.1} parent=27 // pred_fallthru
          _
        %s314 = sand.u32 %s97, 1
        %s315 = scalar_lea.sflag [#allocation5], %s314
        %s316 = sand.u32 %s97, 1
        %s317 = smul.addr %s316, 8
        %s318 = scalar_lea.vmem [#allocation4], %s317
        %s319 = sand.u32 %s123, 1
        %s320 = scalar_lea.sflag [#allocation7], %s319
        %s321 = sand.u32 %s123, 1
        %s322 = smul.addr %s321, 8
        %s323 = scalar_lea.vmem [#allocation6], %s322
        // Predicated region
        $region37: #{tpu_custom_call.1} parent=27 // pred_check
          %p324 = pneg %p107
        $region38: #{tpu_custom_call.1} parent=27 // pred_check_branch
          %326 = sbr.rel (%p324) target = $region40
        $region39: #{tpu_custom_call.1} parent=27 // pred_region
          %328 = vsyncadd %s315, 0
          %s329 = smul.addr %s25, 8
          %s330 = scalar_lea.hbm %s2, %s329
          %s332 = sshll.u32 %s318, 4
          %s333 = int_to_ptr.vmem [resolvable:$true] %s332
          %s334 = sshll.u32 %s330, 4
          %s335 = int_to_ptr.hbm [resolvable:$true] %s334
          %337 = dma.vmem_to_hbm [thread:$0]  %s333, 128, %s335, %s315
        $region40: #{tpu_custom_call.1} parent=27 // pred_fallthru
          _
        // Predicated region
        $region41: #{tpu_custom_call.1} parent=27 // pred_check
          %p338 = pneg %p133
        $region42: #{tpu_custom_call.1} parent=27 // pred_check_branch
          %340 = sbr.rel (%p338) target = $region44
        $region43: #{tpu_custom_call.1} parent=27 // pred_region
          %342 = vsyncadd %s320, 0
          %s343 = smul.addr %s25, 8
          %s344 = scalar_lea.hbm %s3, %s343
          %s346 = sshll.u32 %s323, 4
          %s347 = int_to_ptr.vmem [resolvable:$true] %s346
          %s348 = sshll.u32 %s344, 4
          %s349 = int_to_ptr.hbm [resolvable:$true] %s348
          %351 = dma.vmem_to_hbm [thread:$0]  %s347, 128, %s349, %s320
        $region44: #{tpu_custom_call.1} parent=27 // pred_fallthru
          _
      $region28: #{tpu_custom_call.1} parent=5 // pred_fallthru
        _
      %p352 = scmp.le.s32.totalorder 2, %s16
      // Predicated region
      $region45: #{tpu_custom_call.1} parent=5 // pred_check
        %p353 = pneg %p352
      $region46: #{tpu_custom_call.1} parent=5 // pred_check_branch
        %355 = sbr.rel (%p353) target = $region48
      $region47: #{tpu_custom_call.1} parent=5 // pred_region
        %s356 = ssub.s32 %s16, 2
        // Predicated region
        $region49: #{tpu_custom_call.1} parent=47 // pred_check
          %p357 = pneg %p113
        $region50: #{tpu_custom_call.1} parent=47 // pred_check_branch
          %359 = sbr.rel (%p357) target = $region52
        $region51: #{tpu_custom_call.1} parent=47 // pred_region
          %s360 = sand.u32 %s98, 1
          %s361 = scalar_lea.sflag [#allocation5], %s360
          %s362 = sand.u32 %s98, 1
          %s363 = smul.addr %s362, 8
          %s364 = scalar_lea.vmem [#allocation4], %s363
          %366 = dma.done %s361, 128
        $region52: #{tpu_custom_call.1} parent=47 // pred_fallthru
          _
        // Predicated region
        $region53: #{tpu_custom_call.1} parent=47 // pred_check
          %p367 = pneg %p139
        $region54: #{tpu_custom_call.1} parent=47 // pred_check_branch
          %369 = sbr.rel (%p367) target = $region56
        $region55: #{tpu_custom_call.1} parent=47 // pred_region
          %s370 = sand.u32 %s124, 1
          %s371 = scalar_lea.sflag [#allocation7], %s370
          %s372 = sand.u32 %s124, 1
          %s373 = smul.addr %s372, 8
          %s374 = scalar_lea.vmem [#allocation6], %s373
          %376 = dma.done %s371, 128
        $region56: #{tpu_custom_call.1} parent=47 // pred_fallthru
          _
      $region48: #{tpu_custom_call.1} parent=5 // pred_fallthru
        _
    $region6: #{tpu_custom_call.1} parent=1 // loop_footer
      %s20 = sadd.s32 1, %s16
    $region7: #{tpu_custom_call.1} parent=1 // loop_footer_branch
      %15 = sbr.rel target = $region3
    $region8: #{tpu_custom_call.1} parent=1 // loop_exit
      _
    %377 = vsyncpa [#allocation5], 1
    %s378 = scalar_lea.sflag [#allocation5], 1
    %379 = vsyncpa %s378, 1
    %380 = vsyncpa [#allocation7], 1
    %s381 = scalar_lea.sflag [#allocation7], 1
    %382 = vsyncpa %s381, 1

</llo_original>
